<compile_context>
chip_gen: v6e
topology: v6e:2x2x1
jax: 0.10.0
libtpu: 0.0.40
codegen_flags: <defaults>
</compile_context>

<pallas_src>
import functools

import jax
import jax.numpy as jnp
from jax.experimental import pallas as pl
from jax.experimental.pallas import tpu as pltpu


def _round_up(x, m):
    return (x + m - 1) // m * m


def _sublane(dtype):
    # Sublane tile per dtype width: f32 -> 8, bf16/f16 -> 16, int8/fp8 -> 32.
    return {4: 8, 2: 16, 1: 32}.get(jnp.dtype(dtype).itemsize, 8)


def _concat_feas_kernel(f1_ref, f2_ref, w1_ref, w2_ref, b_ref, out_ref):
    # f1/f2: (tb, dim_inp); w1/w2: (dim_inp, tn); b: (1, tn); out: (tb, tn)
    # Two MXU matmuls against the pre-split weight halves == one matmul on the
    # concatenated features.  Accumulate in f32; f32 epilogue (bias broadcast
    # over sublanes), then lane-dense store.
    acc = jnp.dot(f1_ref[...], w1_ref[...], preferred_element_type=jnp.float32)
    acc = acc + jnp.dot(f2_ref[...], w2_ref[...],
                        preferred_element_type=jnp.float32)
    out_ref[...] = (acc + b_ref[...]).astype(out_ref.dtype)


def prepare_params(weight, bias, *, compute_dtype=None):
    """One-time parameter prep (outside the per-call hot path).

    weight: (dim_out, 2*dim_inp) PyTorch layout; bias: (dim_out,).
    Returns w1, w2 (each (dim_inp, N_pad)) pre-split and lane-padded to a
    multiple of 128, and b2d (1, N_pad) kept in f32 for the epilogue.
    Pass compute_dtype=jnp.bfloat16 to halve weight VMEM/HBM traffic when the
    activations are bf16 (MXU bf16 rate on v6e/v7x).
    """
    dim_out, two_k = weight.shape
    dim_inp = two_k // 2
    n_pad = _round_up(dim_out, 128)
    w_t = weight.T  # (2*dim_inp, dim_out)
    if compute_dtype is not None:
        w_t = w_t.astype(compute_dtype)
    w_t = jnp.pad(w_t, ((0, 0), (0, n_pad - dim_out)))
    w1 = w_t[:dim_inp]
    w2 = w_t[dim_inp:]
    b2d = jnp.pad(bias.astype(jnp.float32), (0, n_pad - dim_out)).reshape(1, n_pad)
    return w1, w2, b2d


@functools.partial(jax.jit, static_argnames=("dim_out",))
def concat_feas_forward(f1, f2, w1, w2, b2d, *, dim_out):
    """f1, f2: (B, dim_inp); w1, w2: (dim_inp, N_pad); b2d: (1, N_pad)."""
    B, dim_inp = f1.shape
    assert f2.shape == (B, dim_inp)
    k1, n_pad = w1.shape
    assert k1 == dim_inp and w2.shape == (dim_inp, n_pad)

    dtype = f1.dtype
    act_bytes = jnp.dtype(dtype).itemsize
    w_bytes = jnp.dtype(w1.dtype).itemsize
    out_bytes = act_bytes
    sub = _sublane(dtype)

    # ---- Tile selection (VMEM budget safe on v5e/v6e/v7x) ----
    budget = 24 << 20  # bytes of tile footprint we allow per kernel

    def weight_tile_bytes(tn_):
        # two weight halves, x2 buffers for safety
        return 2 * 2 * dim_inp * tn_ * w_bytes

    # N-tiling of the (resident) weight only when it would blow VMEM.
    tn = n_pad
    while tn > 128 and weight_tile_bytes(tn) > budget // 2:
        tn = max(128, _round_up(tn // 2, 128))

    # Batch tile: big when there is real work; >= 2 grid steps for mid-size B
    # (v7x has 2 TensorCores); dtype-aware sublane rounding for small B.
    if B <= sub:
        tb = B                      # full-extent batch block
    elif B >= 1024:
        tb = 512
    else:
        tb = min(512, _round_up((B + 1) // 2, sub))

    def act_out_tile_bytes(tb_, tn_):
        return (2 * 2 * tb_ * dim_inp * act_bytes   # f1 + f2, double-buffered
                + 2 * tb_ * tn_ * out_bytes         # out, double-buffered
                + 2 * tn_ * 4)                      # bias (f32)

    while tb > sub and weight_tile_bytes(tn) + act_out_tile_bytes(tb, tn) > budget:
        tb = max(sub, _round_up(tb // 2, sub))

    # Batch innermost so each weight N-slab stays resident across the inner loop.
    grid = (pl.cdiv(n_pad, tn), pl.cdiv(B, tb))

    needed = weight_tile_bytes(tn) + act_out_tile_bytes(tb, tn)
    vmem_limit = int(min(max(needed * 2, 32 << 20), 48 << 20))

    # Real (un-padded-batch) traffic for XLA scheduling.
    flops = 2 * B * (2 * dim_inp) * dim_out
    bytes_accessed = (
        2 * B * dim_inp * act_bytes          # f1, f2
        + 2 * dim_inp * n_pad * w_bytes      # weight halves (each slab read once)
        + n_pad * 4                          # bias
        + B * n_pad * out_bytes)             # output

    out_padded = pl.pallas_call(
        _concat_feas_kernel,
        out_shape=jax.ShapeDtypeStruct((B, n_pad), dtype),
        grid=grid,
        in_specs=[
            pl.BlockSpec((tb, dim_inp), lambda j, i: (i, 0)),
            pl.BlockSpec((tb, dim_inp), lambda j, i: (i, 0)),
            pl.BlockSpec((dim_inp, tn), lambda j, i: (0, j)),   # weight half 1
            pl.BlockSpec((dim_inp, tn), lambda j, i: (0, j)),   # weight half 2
            pl.BlockSpec((1, tn), lambda j, i: (0, j)),         # bias
        ],
        out_specs=pl.BlockSpec((tb, tn), lambda j, i: (i, j)),
        compiler_params=pltpu.CompilerParams(
            dimension_semantics=("parallel", "parallel"),
            vmem_limit_bytes=vmem_limit),
        cost_estimate=pl.CostEstimate(
            flops=flops, transcendentals=0, bytes_accessed=bytes_accessed),
    )(f1, f2, w1, w2, b2d)

    # Lane slice only (no-op when dim_out is a multiple of 128).  Do NOT feed
    # out_padded to any downstream reduction before this slice.
    return out_padded[:, :dim_out]


if __name__ == "__main__":
    # Small, forward-consistent shapes.
    dim_inp = 32
    dim_out = 32

    key = jax.random.PRNGKey(0)
    k_f1, k_f2, k_w, k_b = jax.random.split(key, 4)

    # Deterministic parameter init mimicking nn.Linear's uniform(-1/sqrt(fan_in), +)
    fan_in = 2 * dim_inp
    bound = 1.0 / (fan_in ** 0.5)
    weight = jax.random.uniform(k_w, (dim_out, 2 * dim_inp),
                                minval=-bound, maxval=bound, dtype=jnp.float32)
    bias = jax.random.uniform(k_b, (dim_out,),
                              minval=-bound, maxval=bound, dtype=jnp.float32)

    # One-time param prep (transpose + split + lane padding), outside hot path.
    w1, w2, b2d = prepare_params(weight, bias)
    w1, w2, b2d = jax.block_until_ready((w1, w2, b2d))

    ok = True
    for batch in (8, 20):   # 20 exercises the ragged last batch block
        f1 = jax.random.normal(k_f1, (batch, dim_inp), dtype=jnp.float32)
        f2 = jax.random.normal(k_f2, (batch, dim_inp), dtype=jnp.float32)

        out = concat_feas_forward(f1, f2, w1, w2, b2d, dim_out=dim_out)
        out = jax.block_until_ready(out)

        # Pure-JAX reference (concat + linear, exactly the PyTorch forward).
        ref = jnp.concatenate([f1, f2], axis=-1) @ weight.T + bias
        ok = ok and out.shape == (batch, dim_out)
        ok = ok and bool(jnp.allclose(out, ref, atol=1e-5, rtol=1e-5))

    assert ok, "mismatch vs reference"
    print("KERNEL_OK")
</pallas_src>

<mosaic_0001>
module attributes {stable_mosaic.version = 11 : i64} {
  func.func @_concat_feas_kernel(%arg0: i32, %arg1: i32, %arg2: memref<8x32xf32, #tpu.memory_space<vmem>>, %arg3: memref<8x32xf32, #tpu.memory_space<vmem>>, %arg4: memref<32x128xf32, #tpu.memory_space<vmem>>, %arg5: memref<32x128xf32, #tpu.memory_space<vmem>>, %arg6: memref<1x128xf32, #tpu.memory_space<vmem>>, %arg7: memref<8x128xf32, #tpu.memory_space<vmem>>) attributes {dimension_semantics = [#tpu.dimension_semantics<parallel>, #tpu.dimension_semantics<parallel>], iteration_bounds = array<i64: 1, 1>, scalar_prefetch = 0 : i64, scratch_operands = 0 : i64, tpu.core_type = #tpu.core_type<tc>, window_params = [{transform_indices = @transform_0, window_bounds = array<i64: 8, 32>}, {transform_indices = @transform_1, window_bounds = array<i64: 8, 32>}, {transform_indices = @transform_2, window_bounds = array<i64: 32, 128>}, {transform_indices = @transform_3, window_bounds = array<i64: 32, 128>}, {transform_indices = @transform_4, window_bounds = array<i64: 1, 128>}, {transform_indices = @transform_5, window_bounds = array<i64: 8, 128>}]} {
    %c0 = arith.constant 0 : index
    %c0_0 = arith.constant 0 : index
    %0 = vector.load %arg2[%c0, %c0_0] : memref<8x32xf32, #tpu.memory_space<vmem>>, vector<8x32xf32>
    %c0_1 = arith.constant 0 : index
    %c0_2 = arith.constant 0 : index
    %1 = vector.load %arg4[%c0_1, %c0_2] : memref<32x128xf32, #tpu.memory_space<vmem>>, vector<32x128xf32>
    %cst = arith.constant dense<0.000000e+00> : vector<8x128xf32>
    %2 = tpu.matmul %0, %1, %cst {dimension_numbers = #tpu.dot_dimension_numbers<[1], [0], [0], [1], [0, 0, 1, 1], [], []>} : vector<8x32xf32>, vector<32x128xf32>, vector<8x128xf32> -> vector<8x128xf32>
    %c0_3 = arith.constant 0 : index
    %c0_4 = arith.constant 0 : index
    %3 = vector.load %arg3[%c0_3, %c0_4] : memref<8x32xf32, #tpu.memory_space<vmem>>, vector<8x32xf32>
    %c0_5 = arith.constant 0 : index
    %c0_6 = arith.constant 0 : index
    %4 = vector.load %arg5[%c0_5, %c0_6] : memref<32x128xf32, #tpu.memory_space<vmem>>, vector<32x128xf32>
    %cst_7 = arith.constant dense<0.000000e+00> : vector<8x128xf32>
    %5 = tpu.matmul %3, %4, %cst_7 {dimension_numbers = #tpu.dot_dimension_numbers<[1], [0], [0], [1], [0, 0, 1, 1], [], []>} : vector<8x32xf32>, vector<32x128xf32>, vector<8x128xf32> -> vector<8x128xf32>
    %6 = arith.addf %2, %5 : vector<8x128xf32>
    %c0_8 = arith.constant 0 : index
    %c0_9 = arith.constant 0 : index
    %7 = vector.load %arg6[%c0_8, %c0_9] : memref<1x128xf32, #tpu.memory_space<vmem>>, vector<1x128xf32>
    %8 = vector.broadcast %7 : vector<1x128xf32> to vector<8x128xf32>
    %9 = arith.addf %6, %8 : vector<8x128xf32>
    %c0_10 = arith.constant 0 : index
    %c0_11 = arith.constant 0 : index
    %10 = vector.load %arg7[%c0_10, %c0_11] : memref<8x128xf32, #tpu.memory_space<vmem>>, vector<8x128xf32>
    tpu.vector_store %arg7[%c0_10, %c0_11], %9 {strides = array<i32>} : memref<8x128xf32, #tpu.memory_space<vmem>>, vector<8x128xf32>,
    return
  }
  func.func @transform_0(%arg0: i32, %arg1: i32) -> (i32, i32) {
    %c0_i32 = arith.constant 0 : i32
    %c0_i32_0 = arith.constant 0 : i32
    return %arg1, %c0_i32 : i32, i32
  }
  func.func @transform_1(%arg0: i32, %arg1: i32) -> (i32, i32) {
    %c0_i32 = arith.constant 0 : i32
    %c0_i32_0 = arith.constant 0 : i32
    return %arg1, %c0_i32 : i32, i32
  }
  func.func @transform_2(%arg0: i32, %arg1: i32) -> (i32, i32) {
    %c0_i32 = arith.constant 0 : i32
    %c0_i32_0 = arith.constant 0 : i32
    return %c0_i32, %arg0 : i32, i32
  }
  func.func @transform_3(%arg0: i32, %arg1: i32) -> (i32, i32) {
    %c0_i32 = arith.constant 0 : i32
    %c0_i32_0 = arith.constant 0 : i32
    return %c0_i32, %arg0 : i32, i32
  }
  func.func @transform_4(%arg0: i32, %arg1: i32) -> (i32, i32) {
    %c0_i32 = arith.constant 0 : i32
    %c0_i32_0 = arith.constant 0 : i32
    return %c0_i32, %arg0 : i32, i32
  }
  func.func @transform_5(%arg0: i32, %arg1: i32) -> (i32, i32) {
    %c0_i32 = arith.constant 0 : i32
    return %arg1, %arg0 : i32, i32
  }
}

</mosaic_0001>

<llo_original>
// kernel: concat_feas_forward.1
$region0: #{concat_feas_forward.1}
  #allocation0 [shape = 'u32[]', space=smem, size = 0x4, offset = 0x4, fixed_abs, tag = 'smem constant byte address 0x4 - core index']
  #allocation1 [shape = 'u32[144,128]{1,0:T(1,128)}', space=vmem, size = 0x12000, scoped, tag = 'internal scratch']
  %s0 = inlined_call_operand.hbm [shape: f32[8,32], index: 0, kind: input, shape index: {}]
  %s1 = inlined_call_operand.hbm [shape: f32[8,32], index: 1, kind: input, shape index: {}]
  %s2 = inlined_call_operand.hbm [shape: f32[32,128], index: 2, kind: input, shape index: {}]
  %s3 = inlined_call_operand.hbm [shape: f32[32,128], index: 3, kind: input, shape index: {}]
  %s4 = inlined_call_operand.vmem [shape: f32[1,128], index: 4, kind: input, shape index: {}]
  %s5 = inlined_call_operand.hbm [shape: f32[8,128], index: 5, kind: output, shape index: {}]
  %s6 = sld [smem:[#allocation0]]
  $region46: #{concat_feas_forward.1} parent=0
    _
  %s8 = ssub.s32 1, %s6
  %s9 = scalar_select 0, %s8, %s6
  $region1: #{concat_feas_forward.1} parent=0
    #allocation2 [shape = 'u8[4096]{0}', space=vmem, size = 0x1000, scoped, tag = 'input window, operand 0, single buffered']
    #allocation3 [shape = 's32[1]{0}', space=sflag, size = 0x4, scoped, tag = 'scoped memory for concat_feas_forward.1']
    #allocation4 [shape = 's32[1]{0}', space=sflag, size = 0x4, scoped, tag = 'scoped memory for concat_feas_forward.1']
    #allocation5 [shape = 'u8[4096]{0}', space=vmem, size = 0x1000, scoped, tag = 'input window, operand 1, single buffered']
    #allocation6 [shape = 's32[1]{0}', space=sflag, size = 0x4, scoped, tag = 'scoped memory for concat_feas_forward.1']
    #allocation7 [shape = 'u8[16384]{0}', space=vmem, size = 0x4000, scoped, tag = 'input window, operand 2, single buffered']
    #allocation8 [shape = 'u8[16384]{0}', space=vmem, size = 0x4000, scoped, tag = 'input window, operand 3, single buffered']
    #allocation9 [shape = 's32[1]{0}', space=sflag, size = 0x4, scoped, tag = 'scoped memory for concat_feas_forward.1']
    #allocation10 [shape = 'u8[4096]{0}', space=vmem, size = 0x1000, scoped, tag = 'output window, operand 0, single buffered']
    %10 = vsyncpa [#allocation3], 0
    %11 = vsyncpa [#allocation6], 0
    %12 = vsyncpa [#allocation9], 0
    %13 = vsyncpa [#allocation4], 0
    // Predicated region
    $region2: #{concat_feas_forward.1} parent=1 // pred_check
      _
    $region3: #{concat_feas_forward.1} parent=1 // pred_check_branch
      %15 = sbr.rel (0) target = $region5
    $region4: #{concat_feas_forward.1} parent=1 // pred_region
      %s17 = ssub.s32 128, 128
      %18 = vsyncadd [#allocation3], %s17
      %s20 = sshll.u32 [#allocation2], 4
      %s21 = int_to_ptr.vmem [resolvable:$true] %s20
      %23 = dma.hbm_to_vmem [thread:$0]  %s0, 128, %s21, [#allocation3]
    $region5: #{concat_feas_forward.1} parent=1 // pred_fallthru
      _
    // Predicated region
    $region6: #{concat_feas_forward.1} parent=1 // pred_check
      _
    $region7: #{concat_feas_forward.1} parent=1 // pred_check_branch
      %25 = sbr.rel (0) target = $region9
    $region8: #{concat_feas_forward.1} parent=1 // pred_region
      %s27 = ssub.s32 128, 128
      %28 = vsyncadd [#allocation6], %s27
      %s30 = sshll.u32 [#allocation5], 4
      %s31 = int_to_ptr.vmem [resolvable:$true] %s30
      %33 = dma.hbm_to_vmem [thread:$0]  %s1, 128, %s31, [#allocation6]
    $region9: #{concat_feas_forward.1} parent=1 // pred_fallthru
      _
    // Predicated region
    $region10: #{concat_feas_forward.1} parent=1 // pred_check
      _
    $region11: #{concat_feas_forward.1} parent=1 // pred_check_branch
      %35 = sbr.rel (0) target = $region13
    $region12: #{concat_feas_forward.1} parent=1 // pred_region
      %s37 = ssub.s32 512, 512
      %38 = vsyncadd [#allocation6], %s37
      %s39 = sshll.u32 [#allocation7], 4
      %s40 = int_to_ptr.vmem [resolvable:$true] %s39
      %45 = dma.hbm_to_vmem [thread:$0]  %s2, 512, %s40, [#allocation6], 128, 128, 8
    $region13: #{concat_feas_forward.1} parent=1 // pred_fallthru
      _
    // Predicated region
    $region14: #{concat_feas_forward.1} parent=1 // pred_check
      _
    $region15: #{concat_feas_forward.1} parent=1 // pred_check_branch
      %47 = sbr.rel (0) target = $region17
    $region16: #{concat_feas_forward.1} parent=1 // pred_region
      %s49 = ssub.s32 512, 512
      %50 = vsyncadd [#allocation9], %s49
      %s51 = sshll.u32 [#allocation8], 4
      %s52 = int_to_ptr.vmem [resolvable:$true] %s51
      %57 = dma.hbm_to_vmem [thread:$0]  %s3, 512, %s52, [#allocation9], 128, 128, 8
    $region17: #{concat_feas_forward.1} parent=1 // pred_fallthru
      _
    // Predicated region
    $region18: #{concat_feas_forward.1} parent=1 // pred_check
      _
    $region19: #{concat_feas_forward.1} parent=1 // pred_check_branch
      %59 = sbr.rel (0) target = $region21
    $region20: #{concat_feas_forward.1} parent=1 // pred_region
      _
    $region21: #{concat_feas_forward.1} parent=1 // pred_fallthru
      _
    // Predicated region
    $region22: #{concat_feas_forward.1} parent=1 // pred_check
      _
    $region23: #{concat_feas_forward.1} parent=1 // pred_check_branch
      %61 = sbr.rel (0) target = $region25
    $region24: #{concat_feas_forward.1} parent=1 // pred_region
      %62 = dma.done [#allocation3], 128
    $region25: #{concat_feas_forward.1} parent=1 // pred_fallthru
      _
    // Predicated region
    $region26: #{concat_feas_forward.1} parent=1 // pred_check
      _
    $region27: #{concat_feas_forward.1} parent=1 // pred_check_branch
      %64 = sbr.rel (0) target = $region29
    $region28: #{concat_feas_forward.1} parent=1 // pred_region
      %65 = dma.done [#allocation6], 128
    $region29: #{concat_feas_forward.1} parent=1 // pred_fallthru
      _
    // Predicated region
    $region30: #{concat_feas_forward.1} parent=1 // pred_check
      _
    $region31: #{concat_feas_forward.1} parent=1 // pred_check_branch
      %67 = sbr.rel (0) target = $region33
    $region32: #{concat_feas_forward.1} parent=1 // pred_region
      %68 = dma.done [#allocation6], 512
    $region33: #{concat_feas_forward.1} parent=1 // pred_fallthru
      _
    // Predicated region
    $region34: #{concat_feas_forward.1} parent=1 // pred_check
      _
    $region35: #{concat_feas_forward.1} parent=1 // pred_check_branch
      %70 = sbr.rel (0) target = $region37
    $region36: #{concat_feas_forward.1} parent=1 // pred_region
      %71 = dma.done [#allocation9], 512
    $region37: #{concat_feas_forward.1} parent=1 // pred_fallthru
      _
    %v72 = vld [vmem:[#allocation2] sm:$0xff]
    %v73 = vld [vmem:[#allocation7] sm:$0xff]
    %v74 = vld [vmem:[#allocation7 + $0x8] sm:$0xff]
    %v75 = vld [vmem:[#allocation7 + $0x10] sm:$0xff]
    %v76 = vld [vmem:[#allocation7 + $0x18] sm:$0xff]
    %v77 = vld [vmem:[#allocation5] sm:$0xff]
    %v78 = vld [vmem:[#allocation8] sm:$0xff]
    %v79 = vld [vmem:[#allocation8 + $0x8] sm:$0xff]
    %v80 = vld [vmem:[#allocation8 + $0x10] sm:$0xff]
    %v81 = vld [vmem:[#allocation8 + $0x18] sm:$0xff]
    %vm82 = vcmask 261120
    %v84 = vsel %vm82, %v77, 0
    %86 = vmatprep.subr.mxu0 0.0
    %87 = vmatpush1.msra.mxu0 0.0
    %88 = vmatprep.subr.mxu0 0.0
    %89 = vmatpush1.msra.mxu0 0.0
    %90 = vmatprep.subr.mxu0 0.0
    %91 = vmatpush1.msra.mxu0 0.0
    %92 = vmatprep.subr.mxu0 0.0
    %93 = vmatpush1.msra.mxu0 0.0
    %94 = vmatprep.subr.mxu0 0.0
    %95 = vmatpush1.msra.mxu0 0.0
    %96 = vmatprep.subr.mxu0 0.0
    %97 = vmatpush1.msra.mxu0 0.0
    %98 = vmatprep.subr.mxu0 0.0
    %99 = vmatpush1.msra.mxu0 0.0
    %100 = vmatprep.subr.mxu0 0.0
    %101 = vmatpush1.msra.mxu0 0.0
    %102 = vmatprep.subr.mxu0 0.0
    %103 = vmatpush1.msra.mxu0 0.0
    %104 = vmatprep.subr.mxu0 0.0
    %105 = vmatpush1.msra.mxu0 0.0
    %106 = vmatprep.subr.mxu0 0.0
    %107 = vmatpush1.msra.mxu0 0.0
    %108 = vmatprep.subr.mxu0 0.0
    %109 = vmatpush1.msra.mxu0 0.0
    %110 = vmatprep.subr.mxu0 0.0
    %111 = vmatpush1.msra.mxu0 %v81
    %112 = vmatprep.subr.mxu0 0.0
    %113 = vmatpush1.msra.mxu0 %v80
    %114 = vmatprep.subr.mxu0 0.0
    %115 = vmatpush1.msra.mxu0 %v79
    %116 = vmatprep.subr.mxu0 0.0
    %117 = vmatpush1.msra.mxu0 %v78
    %118 = vmatprep.subr.mxu0 0.0
    %119 = vmatpush2.msra.mxu0 0.0
    %120 = vmatprep.subr.mxu0 0.0
    %121 = vmatpush2.msra.mxu0 0.0
    %122 = vmatprep.subr.mxu0 0.0
    %123 = vmatpush2.msra.mxu0 0.0
    %124 = vmatprep.subr.mxu0 0.0
    %125 = vmatpush2.msra.mxu0 0.0
    %126 = vmatprep.subr.mxu0 0.0
    %127 = vmatpush2.msra.mxu0 0.0
    %128 = vmatprep.subr.mxu0 0.0
    %129 = vmatpush2.msra.mxu0 0.0
    %130 = vmatprep.subr.mxu0 0.0
    %131 = vmatpush2.msra.mxu0 0.0
    %132 = vmatprep.subr.mxu0 0.0
    %133 = vmatpush2.msra.mxu0 0.0
    %134 = vmatprep.subr.mxu0 0.0
    %135 = vmatpush2.msra.mxu0 0.0
    %136 = vmatprep.subr.mxu0 0.0
    %137 = vmatpush2.msra.mxu0 0.0
    %138 = vmatprep.subr.mxu0 0.0
    %139 = vmatpush2.msra.mxu0 0.0
    %140 = vmatprep.subr.mxu0 0.0
    %141 = vmatpush2.msra.mxu0 0.0
    %142 = vmatprep.subr.mxu0 0.0
    %143 = vmatpush2.msra.mxu0 0.0
    %144 = vmatprep.subr.mxu0 0.0
    %145 = vmatpush2.msra.mxu0 0.0
    %146 = vmatprep.subr.mxu0 0.0
    %147 = vmatpush2.msra.mxu0 0.0
    %148 = vmatprep.subr.mxu0 0.0
    %149 = vmatpush2.msra.mxu0 0.0
    %150 = vmatprep.mubr.f32.mxu0 0.0
    %151 = vmatmul.mubr.f32.gmra.mxu0 %v84
    %v152 = vpop.f32.mrf.mxu0
    %v153 = vadd.f32 0.0, %v152
    %v154 = vpop.f32.mrf.mxu0
    %155 = vdwg.mxu0
    %v157 = vsel %vm82, %v72, 0
    %159 = vmatprep.subr.mxu0 0.0
    %160 = vmatpush1.msra.mxu0 0.0
    %161 = vmatprep.subr.mxu0 0.0
    %162 = vmatpush1.msra.mxu0 0.0
    %163 = vmatprep.subr.mxu0 0.0
    %164 = vmatpush1.msra.mxu0 0.0
    %165 = vmatprep.subr.mxu0 0.0
    %166 = vmatpush1.msra.mxu0 0.0
    %167 = vmatprep.subr.mxu0 0.0
    %168 = vmatpush1.msra.mxu0 0.0
    %169 = vmatprep.subr.mxu0 0.0
    %170 = vmatpush1.msra.mxu0 0.0
    %171 = vmatprep.subr.mxu0 0.0
    %172 = vmatpush1.msra.mxu0 0.0
    %173 = vmatprep.subr.mxu0 0.0
    %174 = vmatpush1.msra.mxu0 0.0
    %175 = vmatprep.subr.mxu0 0.0
    %176 = vmatpush1.msra.mxu0 0.0
    %177 = vmatprep.subr.mxu0 0.0
    %178 = vmatpush1.msra.mxu0 0.0
    %179 = vmatprep.subr.mxu0 0.0
    %180 = vmatpush1.msra.mxu0 0.0
    %181 = vmatprep.subr.mxu0 0.0
    %182 = vmatpush1.msra.mxu0 0.0
    %183 = vmatprep.subr.mxu0 0.0
    %184 = vmatpush1.msra.mxu0 %v76
    %185 = vmatprep.subr.mxu0 0.0
    %186 = vmatpush1.msra.mxu0 %v75
    %187 = vmatprep.subr.mxu0 0.0
    %188 = vmatpush1.msra.mxu0 %v74
    %189 = vmatprep.subr.mxu0 0.0
    %190 = vmatpush1.msra.mxu0 %v73
    %191 = vmatprep.subr.mxu0 0.0
    %192 = vmatpush2.msra.mxu0 0.0
    %193 = vmatprep.subr.mxu0 0.0
    %194 = vmatpush2.msra.mxu0 0.0
    %195 = vmatprep.subr.mxu0 0.0
    %196 = vmatpush2.msra.mxu0 0.0
    %197 = vmatprep.subr.mxu0 0.0
    %198 = vmatpush2.msra.mxu0 0.0
    %199 = vmatprep.subr.mxu0 0.0
    %200 = vmatpush2.msra.mxu0 0.0
    %201 = vmatprep.subr.mxu0 0.0
    %202 = vmatpush2.msra.mxu0 0.0
    %203 = vmatprep.subr.mxu0 0.0
    %204 = vmatpush2.msra.mxu0 0.0
    %205 = vmatprep.subr.mxu0 0.0
    %206 = vmatpush2.msra.mxu0 0.0
    %207 = vmatprep.subr.mxu0 0.0
    %208 = vmatpush2.msra.mxu0 0.0
    %209 = vmatprep.subr.mxu0 0.0
    %210 = vmatpush2.msra.mxu0 0.0
    %211 = vmatprep.subr.mxu0 0.0
    %212 = vmatpush2.msra.mxu0 0.0
    %213 = vmatprep.subr.mxu0 0.0
    %214 = vmatpush2.msra.mxu0 0.0
    %215 = vmatprep.subr.mxu0 0.0
    %216 = vmatpush2.msra.mxu0 0.0
    %217 = vmatprep.subr.mxu0 0.0
    %218 = vmatpush2.msra.mxu0 0.0
    %219 = vmatprep.subr.mxu0 0.0
    %220 = vmatpush2.msra.mxu0 0.0
    %221 = vmatprep.subr.mxu0 0.0
    %222 = vmatpush2.msra.mxu0 0.0
    %223 = vmatprep.mubr.f32.mxu0 0.0
    %224 = vmatmul.mubr.f32.gmra.mxu0 %v157
    %v225 = vpop.f32.mrf.mxu0
    %v226 = vadd.f32 %v153, %v225
    %v227 = vpop.f32.mrf.mxu0
    %228 = vdwg.mxu0
    %v229 = vld [vmem:[%s4] sm:$0x1]
    %v231 = vlaneseq
    %v232 = vshrl.u32 %v231, 7
    %v233 = vsub.s32 0, %v232
    %v234 = vrot.slane %v229, %v233
    %v236 = vadd.f32 %v226, %v234
    %237 = vst [vmem:[#allocation10] sm:$0xff] %v236
    // Predicated region
    $region38: #{concat_feas_forward.1} parent=1 // pred_check
      _
    $region39: #{concat_feas_forward.1} parent=1 // pred_check_branch
      %239 = sbr.rel (0) target = $region41
    $region40: #{concat_feas_forward.1} parent=1 // pred_region
      %s241 = ssub.s32 128, 128
      %242 = vsyncadd [#allocation4], %s241
      %s244 = sshll.u32 [#allocation10], 4
      %s245 = int_to_ptr.vmem [resolvable:$true] %s244
      %247 = dma.vmem_to_hbm [thread:$0]  %s245, 128, %s5, [#allocation4]
    $region41: #{concat_feas_forward.1} parent=1 // pred_fallthru
      _
    // Predicated region
    $region42: #{concat_feas_forward.1} parent=1 // pred_check
      _
    $region43: #{concat_feas_forward.1} parent=1 // pred_check_branch
      %249 = sbr.rel (0) target = $region45
    $region44: #{concat_feas_forward.1} parent=1 // pred_region
      %250 = dma.done [#allocation4], 128
    $region45: #{concat_feas_forward.1} parent=1 // pred_fallthru
      _
    %251 = vsyncpa [#allocation3], 1
    %252 = vsyncpa [#allocation6], 1
    %253 = vsyncpa [#allocation9], 1
    %254 = vsyncpa [#allocation4], 1

</llo_original>
